<compile_context>
chip_gen: v7x
topology: tpu7x:2x2x1
jax: 0.10.0
libtpu: 0.0.40
codegen_flags: <defaults>
</compile_context>

<pallas_src>
import jax
import jax.numpy as jnp
from jax import lax
from jax.experimental import pallas as pl
from jax.experimental.pallas import tpu as pltpu


_TBC = 128  # inner batch sub-chunk: bounds live vregs, multiple of the 8-sublane granule


def hybrid_dynamics_kernel(t_ref, x_ref, g_ref, w1_ref, b1_ref, wt_ref,
                           w2_ref, b2_ref, out_ref):
    t = t_ref[0]                                   # scalar time from SMEM

    # Hoisted per-grid-step constants.  The weight BlockSpecs always map to
    # block (0, 0), so these tiles are VMEM-resident across the whole grid.
    w1 = w1_ref[...]                               # (S, H)
    w2 = w2_ref[...]                               # (H, S)
    g_row = g_ref[...]                             # (1, S)  growth rates
    b2_row = b2_ref[...]                           # (1, S)
    bias_row = b1_ref[...] + t * wt_ref[...]       # (1, H)  time-conditioned bias

    tb = out_ref.shape[0]                          # static block batch size
    n_chunks = tb // _TBC

    def compute_chunk(start):
        xc = x_ref[pl.ds(start, _TBC), :]          # (TBC, S) natural layout
        # Layer 1 on the MXU (frees VALU/XLU vs. unrolled outer-product FMAs).
        hc = jnp.tanh(
            jnp.dot(xc, w1, preferred_element_type=jnp.float32) + bias_row)
        # Layer 2 on the MXU.
        latent = jnp.dot(hc, w2, preferred_element_type=jnp.float32) + b2_row
        # Known derivative + latent derivative, stored back in natural layout.
        out_ref[pl.ds(start, _TBC), :] = (g_row * xc + latent).astype(out_ref.dtype)

    if n_chunks == 1:
        compute_chunk(0)
    else:
        # fori_loop (not a Python for) so live ranges stay bounded per chunk.
        def body(c, carry):
            compute_chunk(pl.multiple_of(c * _TBC, _TBC))
            return carry
        lax.fori_loop(0, n_chunks, body, 0)


def hybrid_dynamics(t, x, growth_rates, w1, b1, wt, w2, b2, *, tb=None):
    """out = growth_rates*x + tanh(x@w1 + b1 + t*wt)@w2 + b2, with x: (B, S)."""
    B, S = x.shape
    H = w1.shape[1]

    if tb is None:
        # Big batch tiles amortize the ~600-cycle per-grid-step overhead, but keep
        # >= 2 grid steps when the batch allows so both v7x TensorCores get work.
        if B > 512:
            tb = 512
        elif B > 256:
            tb = 256
        else:
            tb = 128
    assert tb % _TBC == 0

    # Parameter prep only (O(1) in batch) — no batch-sized transpose/pad/slice.
    g = jnp.asarray(growth_rates, jnp.float32).reshape(1, S)
    b1r = jnp.asarray(b1, jnp.float32).reshape(1, H)
    wtr = jnp.asarray(wt, jnp.float32).reshape(1, H)
    b2r = jnp.asarray(b2, jnp.float32).reshape(1, S)
    w1r = jnp.asarray(w1, jnp.float32)
    w2r = jnp.asarray(w2, jnp.float32)
    t_arr = jnp.asarray(t, jnp.float32).reshape((1,))

    grid = (pl.cdiv(B, tb),)   # ragged last block: Pallas masks the boundary store

    return pl.pallas_call(
        hybrid_dynamics_kernel,
        out_shape=jax.ShapeDtypeStruct((B, S), x.dtype),
        grid=grid,
        in_specs=[
            pl.BlockSpec(memory_space=pltpu.MemorySpace.SMEM),   # t (1,) scalar
            pl.BlockSpec((tb, S), lambda i: (i, 0)),             # x batch tile
            pl.BlockSpec((1, S), lambda i: (0, 0)),              # growth_rates (resident)
            pl.BlockSpec((S, H), lambda i: (0, 0)),              # W1 (resident)
            pl.BlockSpec((1, H), lambda i: (0, 0)),              # b1 (resident)
            pl.BlockSpec((1, H), lambda i: (0, 0)),              # wt (resident)
            pl.BlockSpec((H, S), lambda i: (0, 0)),              # W2 (resident)
            pl.BlockSpec((1, S), lambda i: (0, 0)),              # b2 (resident)
        ],
        out_specs=pl.BlockSpec((tb, S), lambda i: (i, 0)),
        compiler_params=pltpu.CompilerParams(
            dimension_semantics=("parallel",)),
    )(t_arr, x, g, w1r, b1r, wtr, w2r, b2r)


def reference(t, x, growth_rates, w1, b1, wt, w2, b2):
    known = growth_rates * x
    h = jnp.tanh(x @ w1 + b1 + t * wt)
    latent = h @ w2 + b2
    return known + latent


if __name__ == "__main__":
    key = jax.random.PRNGKey(0)
    B, S, H = 1024, 8, 32   # batch (2 grid steps x 4 inner chunks), state_dim, hidden

    k = jax.random.split(key, 7)
    x = jax.random.normal(k[0], (B, S), jnp.float32)
    growth_rates = jax.random.normal(k[1], (1, S), jnp.float32) * 0.1
    w1 = jax.random.normal(k[2], (S, H), jnp.float32) * (1.0 / jnp.sqrt(S))
    b1 = jax.random.normal(k[3], (1, H), jnp.float32) * 0.01
    wt = jax.random.normal(k[4], (1, H), jnp.float32) * 0.01
    w2 = jax.random.normal(k[5], (H, S), jnp.float32) * (1.0 / jnp.sqrt(H))
    b2 = jax.random.normal(k[6], (1, S), jnp.float32) * 0.01
    t = 0.5

    out = hybrid_dynamics(t, x, growth_rates, w1, b1, wt, w2, b2)
    jax.block_until_ready(out)

    ref = reference(t, x, growth_rates, w1, b1, wt, w2, b2)
    assert out.shape == (B, S)
    assert jnp.allclose(out, ref, atol=1e-4, rtol=1e-5), "mismatch vs reference"
    print("KERNEL_OK")
</pallas_src>

<mosaic_0001>
module attributes {stable_mosaic.version = 11 : i64} {
  func.func @hybrid_dynamics_kernel(%arg0: i32, %arg1: memref<1xf32, #tpu.memory_space<smem>>, %arg2: memref<512x8xf32, #tpu.memory_space<vmem>>, %arg3: memref<1x8xf32, #tpu.memory_space<vmem>>, %arg4: memref<8x32xf32, #tpu.memory_space<vmem>>, %arg5: memref<1x32xf32, #tpu.memory_space<vmem>>, %arg6: memref<1x32xf32, #tpu.memory_space<vmem>>, %arg7: memref<32x8xf32, #tpu.memory_space<vmem>>, %arg8: memref<1x8xf32, #tpu.memory_space<vmem>>, %arg9: memref<512x8xf32, #tpu.memory_space<vmem>>) attributes {dimension_semantics = [#tpu.dimension_semantics<parallel>], iteration_bounds = array<i64: 2>, scalar_prefetch = 0 : i64, scratch_operands = 0 : i64, tpu.core_type = #tpu.core_type<tc>, window_params = [{transform_indices = @transform_0, window_bounds = array<i64: 1>}, {transform_indices = @transform_1, window_bounds = array<i64: 512, 8>}, {pipeline_mode = #tpu.pipeline_mode<synchronous>, transform_indices = @transform_2, window_bounds = array<i64: 1, 8>}, {pipeline_mode = #tpu.pipeline_mode<synchronous>, transform_indices = @transform_3, window_bounds = array<i64: 8, 32>}, {pipeline_mode = #tpu.pipeline_mode<synchronous>, transform_indices = @transform_4, window_bounds = array<i64: 1, 32>}, {pipeline_mode = #tpu.pipeline_mode<synchronous>, transform_indices = @transform_5, window_bounds = array<i64: 1, 32>}, {pipeline_mode = #tpu.pipeline_mode<synchronous>, transform_indices = @transform_6, window_bounds = array<i64: 32, 8>}, {pipeline_mode = #tpu.pipeline_mode<synchronous>, transform_indices = @transform_7, window_bounds = array<i64: 1, 8>}, {transform_indices = @transform_8, window_bounds = array<i64: 512, 8>}]} {
    %c0 = arith.constant 0 : index
    %0 = memref.load %arg1[%c0] : memref<1xf32, #tpu.memory_space<smem>>
    %c0_0 = arith.constant 0 : index
    %c0_1 = arith.constant 0 : index
    %1 = vector.load %arg4[%c0_0, %c0_1] : memref<8x32xf32, #tpu.memory_space<vmem>>, vector<8x32xf32>
    %c0_2 = arith.constant 0 : index
    %c0_3 = arith.constant 0 : index
    %2 = vector.load %arg7[%c0_2, %c0_3] : memref<32x8xf32, #tpu.memory_space<vmem>>, vector<32x8xf32>
    %c0_4 = arith.constant 0 : index
    %c0_5 = arith.constant 0 : index
    %3 = vector.load %arg3[%c0_4, %c0_5] : memref<1x8xf32, #tpu.memory_space<vmem>>, vector<1x8xf32>
    %c0_6 = arith.constant 0 : index
    %c0_7 = arith.constant 0 : index
    %4 = vector.load %arg8[%c0_6, %c0_7] : memref<1x8xf32, #tpu.memory_space<vmem>>, vector<1x8xf32>
    %c0_8 = arith.constant 0 : index
    %c0_9 = arith.constant 0 : index
    %5 = vector.load %arg5[%c0_8, %c0_9] : memref<1x32xf32, #tpu.memory_space<vmem>>, vector<1x32xf32>
    %c0_10 = arith.constant 0 : index
    %c0_11 = arith.constant 0 : index
    %6 = vector.load %arg6[%c0_10, %c0_11] : memref<1x32xf32, #tpu.memory_space<vmem>>, vector<1x32xf32>
    %7 = vector.broadcast %0 : f32 to vector<1x32xf32>
    %8 = arith.mulf %7, %6 : vector<1x32xf32>
    %9 = arith.addf %5, %8 : vector<1x32xf32>
    %c0_i32 = arith.constant 0 : i32
    %c4_i32 = arith.constant 4 : i32
    %10 = arith.addi %c0_i32, %c4_i32 : i32
    %c1_i32 = arith.constant 1 : i32
    scf.for %arg10 = %c0_i32 to %10 step %c1_i32  : i32 {
      %c128_i32 = arith.constant 128 : i32
      %11 = arith.muli %arg10, %c128_i32 : i32
      %12 = tpu.assume_multiple %11, 128 : i32
      %13 = arith.index_cast %12 : i32 to index
      %c0_13 = arith.constant 0 : index
      %14 = vector.load %arg2[%13, %c0_13] : memref<512x8xf32, #tpu.memory_space<vmem>>, vector<128x8xf32>
      %cst = arith.constant dense<0.000000e+00> : vector<128x32xf32>
      %15 = tpu.matmul %14, %1, %cst {dimension_numbers = #tpu.dot_dimension_numbers<[1], [0], [0], [1], [0, 0, 1, 1], [], []>} : vector<128x8xf32>, vector<8x32xf32>, vector<128x32xf32> -> vector<128x32xf32>
      %16 = vector.broadcast %9 : vector<1x32xf32> to vector<128x32xf32>
      %17 = arith.addf %15, %16 : vector<128x32xf32>
      %18 = math.tanh %17 : vector<128x32xf32>
      %cst_14 = arith.constant dense<0.000000e+00> : vector<128x8xf32>
      %19 = tpu.matmul %18, %2, %cst_14 {dimension_numbers = #tpu.dot_dimension_numbers<[1], [0], [0], [1], [0, 0, 1, 1], [], []>} : vector<128x32xf32>, vector<32x8xf32>, vector<128x8xf32> -> vector<128x8xf32>
      %20 = vector.broadcast %4 : vector<1x8xf32> to vector<128x8xf32>
      %21 = arith.addf %19, %20 : vector<128x8xf32>
      %22 = vector.broadcast %3 : vector<1x8xf32> to vector<128x8xf32>
      %23 = arith.mulf %22, %14 : vector<128x8xf32>
      %24 = arith.addf %23, %21 : vector<128x8xf32>
      %25 = arith.index_cast %12 : i32 to index
      %c0_15 = arith.constant 0 : index
      %26 = vector.load %arg9[%25, %c0_15] : memref<512x8xf32, #tpu.memory_space<vmem>>, vector<128x8xf32>
      tpu.vector_store %arg9[%25, %c0_15], %24 {strides = array<i32>} : memref<512x8xf32, #tpu.memory_space<vmem>>, vector<128x8xf32>,
    }
    %c4_i32_12 = arith.constant 4 : i32
    return
  }
  func.func @transform_0(%arg0: i32) -> i32 {
    %c0_i32 = arith.constant 0 : i32
    %c0_i32_0 = arith.constant 0 : i32
    return %c0_i32 : i32
  }
  func.func @transform_1(%arg0: i32) -> (i32, i32) {
    %c0_i32 = arith.constant 0 : i32
    %c0_i32_0 = arith.constant 0 : i32
    return %arg0, %c0_i32 : i32, i32
  }
  func.func @transform_2(%arg0: i32) -> (i32, i32) {
    %c0_i32 = arith.constant 0 : i32
    %c0_i32_0 = arith.constant 0 : i32
    %c0_i32_1 = arith.constant 0 : i32
    return %c0_i32, %c0_i32_0 : i32, i32
  }
  func.func @transform_3(%arg0: i32) -> (i32, i32) {
    %c0_i32 = arith.constant 0 : i32
    %c0_i32_0 = arith.constant 0 : i32
    %c0_i32_1 = arith.constant 0 : i32
    return %c0_i32, %c0_i32_0 : i32, i32
  }
  func.func @transform_4(%arg0: i32) -> (i32, i32) {
    %c0_i32 = arith.constant 0 : i32
    %c0_i32_0 = arith.constant 0 : i32
    %c0_i32_1 = arith.constant 0 : i32
    return %c0_i32, %c0_i32_0 : i32, i32
  }
  func.func @transform_5(%arg0: i32) -> (i32, i32) {
    %c0_i32 = arith.constant 0 : i32
    %c0_i32_0 = arith.constant 0 : i32
    %c0_i32_1 = arith.constant 0 : i32
    return %c0_i32, %c0_i32_0 : i32, i32
  }
  func.func @transform_6(%arg0: i32) -> (i32, i32) {
    %c0_i32 = arith.constant 0 : i32
    %c0_i32_0 = arith.constant 0 : i32
    %c0_i32_1 = arith.constant 0 : i32
    return %c0_i32, %c0_i32_0 : i32, i32
  }
  func.func @transform_7(%arg0: i32) -> (i32, i32) {
    %c0_i32 = arith.constant 0 : i32
    %c0_i32_0 = arith.constant 0 : i32
    %c0_i32_1 = arith.constant 0 : i32
    return %c0_i32, %c0_i32_0 : i32, i32
  }
  func.func @transform_8(%arg0: i32) -> (i32, i32) {
    %c0_i32 = arith.constant 0 : i32
    %c0_i32_0 = arith.constant 0 : i32
    return %arg0, %c0_i32 : i32, i32
  }
}

</mosaic_0001>

<llo_original>
// kernel: tpu_custom_call.1
$region0: #{tpu_custom_call.1}
  #allocation0 [shape = 'u32[]', space=smem, size = 0x4, offset = 0x4, fixed_abs, tag = 'smem constant byte address 0x4 - core index']
  #allocation1 [shape = 'u32[144,128]{1,0:T(1,128)}', space=vmem, size = 0x12000, scoped, tag = 'internal scratch']
  #allocation2 [shape = 'f32[1]{0:T(128)S(6)}', space=smem, size = 0x200, scoped, tag = 'scoped memory for tpu_custom_call.1']
  %s0 = inlined_call_operand.<no memory space> [shape: f32[1], index: 0, kind: input, shape index: {}]
  %s1 = inlined_call_operand.vmem [shape: f32[1024,8], index: 1, kind: input, shape index: {}]
  %s2 = inlined_call_operand.vmem [shape: f32[1,8], index: 2, kind: input, shape index: {}]
  %s3 = inlined_call_operand.vmem [shape: f32[8,32], index: 3, kind: input, shape index: {}]
  %s4 = inlined_call_operand.vmem [shape: f32[1,32], index: 4, kind: input, shape index: {}]
  %s5 = inlined_call_operand.vmem [shape: f32[1,32], index: 5, kind: input, shape index: {}]
  %s6 = inlined_call_operand.vmem [shape: f32[32,8], index: 6, kind: input, shape index: {}]
  %s7 = inlined_call_operand.vmem [shape: f32[1,8], index: 7, kind: input, shape index: {}]
  %s8 = inlined_call_operand.vmem [shape: f32[1024,8], index: 8, kind: output, shape index: {}]
  %s9 = sld [smem:[#allocation0]]
  $region72: #{tpu_custom_call.1} parent=0
    _
  %s11 = ssub.s32 1, %s9
  %s12 = scalar_select 0, %s11, %s9
  %13 = sst [smem:[#allocation2]] %s0
  loop: start=0, step=1, limit=4
  $region2: #{tpu_custom_call.1} parent=0 // loop_pre_header
    _
  $region3: #{tpu_custom_call.1} parent=0 // loop_header
    %s15 = sphi 0, %s19
    %p16 = scmp.ge.s32.totalorder %s15, 4
    %s23 = sphi 0, %s23
    %s25 = sphi 0, %s23
    %s26 = sphi 0, %s25
    %s40 = sphi 0, %s26
    %s46 = sphi 0, %s48
    %s49 = sphi 0, %s46
    %s50 = sphi 0, %s49
    %s66 = sphi 0, %s50
    %s70 = sphi 0, %s70
    %s72 = sphi 0, %s70
    %s73 = sphi 0, %s72
    %s87 = sphi 0, %s73
    %s91 = sphi 0, %s91
    %s93 = sphi 0, %s91
    %s94 = sphi 0, %s93
    %s108 = sphi 0, %s94
    %s112 = sphi 0, %s112
    %s114 = sphi 0, %s112
    %s115 = sphi 0, %s114
    %s129 = sphi 0, %s115
    %s133 = sphi 0, %s133
    %s135 = sphi 0, %s133
    %s136 = sphi 0, %s135
    %s150 = sphi 0, %s136
    %s154 = sphi 0, %s154
    %s156 = sphi 0, %s154
    %s157 = sphi 0, %s156
    %s171 = sphi 0, %s157
    %s175 = sphi 0, %s175
    %s177 = sphi 0, %s175
    %s178 = sphi 0, %s177
    %s192 = sphi 0, %s178
    %s198 = sphi 0, %s200
    %s201 = sphi 0, %s198
    %s202 = sphi 0, %s201
    %s218 = sphi 0, %s202
  $region4: #{tpu_custom_call.1} parent=0 // loop_header_branch
    %18 = sbr.rel (%p16) target = $region8
  $region5: #{tpu_custom_call.1} parent=0 // loop_body
    %s20 = ssub.s32 %s15, 1
    %s21 = ssub.s32 %s15, 2
    %s22 = sadd.s32 %s15, 1
    %s24 = sadd.s32 %s23, 1
    %p27 = scmp.eq.s32.totalorder %s15, 1
    %p28 = scmp.ne.s32.totalorder %s23, %s25
    %p29 = scmp.eq.s32.totalorder %s15, 0
    %p30 = por %p28, %p29
    %p31 = scmp.ne.s32.totalorder %s23, %s25
    %p32 = scmp.eq.s32.totalorder %s20, 1
    %p33 = por %p31, %p32
    %p34 = scmp.ne.s32.totalorder %s25, %s26
    %p35 = scmp.eq.s32.totalorder %s20, 0
    %p36 = por %p34, %p35
    %p37 = scmp.ne.s32.totalorder %s25, %s26
    %p38 = scmp.eq.s32.totalorder %s21, 1
    %p39 = por %p37, %p38
    %p41 = scmp.ne.s32.totalorder %s26, %s40
    %p42 = scmp.eq.s32.totalorder %s21, 0
    %p43 = por %p41, %p42
    %s44 = ssub.s32 %s15, %s22
    %p45 = scmp.eq.s32.totalorder %s44, 0
    %s47 = sadd.s32 %s46, 1
    %s48 = scalar_select %p45, %s46, %s47
    %p51 = pneg %p45
    %p52 = scmp.eq.s32.totalorder %s15, 1
    %p53 = por %p51, %p52
    %p54 = scmp.ne.s32.totalorder %s46, %s49
    %p55 = scmp.eq.s32.totalorder %s15, 0
    %p56 = por %p54, %p55
    %p57 = scmp.ne.s32.totalorder %s46, %s49
    %p58 = scmp.eq.s32.totalorder %s20, 1
    %p59 = por %p57, %p58
    %p60 = scmp.ne.s32.totalorder %s49, %s50
    %p61 = scmp.eq.s32.totalorder %s20, 0
    %p62 = por %p60, %p61
    %p63 = scmp.ne.s32.totalorder %s49, %s50
    %p64 = scmp.eq.s32.totalorder %s21, 1
    %p65 = por %p63, %p64
    %p67 = scmp.ne.s32.totalorder %s50, %s66
    %p68 = scmp.eq.s32.totalorder %s21, 0
    %p69 = por %p67, %p68
    %s71 = sadd.s32 %s70, 1
    %p74 = scmp.eq.s32.totalorder %s15, 1
    %p75 = scmp.ne.s32.totalorder %s70, %s72
    %p76 = scmp.eq.s32.totalorder %s15, 0
    %p77 = por %p75, %p76
    %p78 = scmp.ne.s32.totalorder %s70, %s72
    %p79 = scmp.eq.s32.totalorder %s20, 1
    %p80 = por %p78, %p79
    %p81 = scmp.ne.s32.totalorder %s72, %s73
    %p82 = scmp.eq.s32.totalorder %s20, 0
    %p83 = por %p81, %p82
    %p84 = scmp.ne.s32.totalorder %s72, %s73
    %p85 = scmp.eq.s32.totalorder %s21, 1
    %p86 = por %p84, %p85
    %p88 = scmp.ne.s32.totalorder %s73, %s87
    %p89 = scmp.eq.s32.totalorder %s21, 0
    %p90 = por %p88, %p89
    %s92 = sadd.s32 %s91, 1
    %p95 = scmp.eq.s32.totalorder %s15, 1
    %p96 = scmp.ne.s32.totalorder %s91, %s93
    %p97 = scmp.eq.s32.totalorder %s15, 0
    %p98 = por %p96, %p97
    %p99 = scmp.ne.s32.totalorder %s91, %s93
    %p100 = scmp.eq.s32.totalorder %s20, 1
    %p101 = por %p99, %p100
    %p102 = scmp.ne.s32.totalorder %s93, %s94
    %p103 = scmp.eq.s32.totalorder %s20, 0
    %p104 = por %p102, %p103
    %p105 = scmp.ne.s32.totalorder %s93, %s94
    %p106 = scmp.eq.s32.totalorder %s21, 1
    %p107 = por %p105, %p106
    %p109 = scmp.ne.s32.totalorder %s94, %s108
    %p110 = scmp.eq.s32.totalorder %s21, 0
    %p111 = por %p109, %p110
    %s113 = sadd.s32 %s112, 1
    %p116 = scmp.eq.s32.totalorder %s15, 1
    %p117 = scmp.ne.s32.totalorder %s112, %s114
    %p118 = scmp.eq.s32.totalorder %s15, 0
    %p119 = por %p117, %p118
    %p120 = scmp.ne.s32.totalorder %s112, %s114
    %p121 = scmp.eq.s32.totalorder %s20, 1
    %p122 = por %p120, %p121
    %p123 = scmp.ne.s32.totalorder %s114, %s115
    %p124 = scmp.eq.s32.totalorder %s20, 0
    %p125 = por %p123, %p124
    %p126 = scmp.ne.s32.totalorder %s114, %s115
    %p127 = scmp.eq.s32.totalorder %s21, 1
    %p128 = por %p126, %p127
    %p130 = scmp.ne.s32.totalorder %s115, %s129
    %p131 = scmp.eq.s32.totalorder %s21, 0
    %p132 = por %p130, %p131
    %s134 = sadd.s32 %s133, 1
    %p137 = scmp.eq.s32.totalorder %s15, 1
    %p138 = scmp.ne.s32.totalorder %s133, %s135
    %p139 = scmp.eq.s32.totalorder %s15, 0
    %p140 = por %p138, %p139
    %p141 = scmp.ne.s32.totalorder %s133, %s135
    %p142 = scmp.eq.s32.totalorder %s20, 1
    %p143 = por %p141, %p142
    %p144 = scmp.ne.s32.totalorder %s135, %s136
    %p145 = scmp.eq.s32.totalorder %s20, 0
    %p146 = por %p144, %p145
    %p147 = scmp.ne.s32.totalorder %s135, %s136
    %p148 = scmp.eq.s32.totalorder %s21, 1
    %p149 = por %p147, %p148
    %p151 = scmp.ne.s32.totalorder %s136, %s150
    %p152 = scmp.eq.s32.totalorder %s21, 0
    %p153 = por %p151, %p152
    %s155 = sadd.s32 %s154, 1
    %p158 = scmp.eq.s32.totalorder %s15, 1
    %p159 = scmp.ne.s32.totalorder %s154, %s156
    %p160 = scmp.eq.s32.totalorder %s15, 0
    %p161 = por %p159, %p160
    %p162 = scmp.ne.s32.totalorder %s154, %s156
    %p163 = scmp.eq.s32.totalorder %s20, 1
    %p164 = por %p162, %p163
    %p165 = scmp.ne.s32.totalorder %s156, %s157
    %p166 = scmp.eq.s32.totalorder %s20, 0
    %p167 = por %p165, %p166
    %p168 = scmp.ne.s32.totalorder %s156, %s157
    %p169 = scmp.eq.s32.totalorder %s21, 1
    %p170 = por %p168, %p169
    %p172 = scmp.ne.s32.totalorder %s157, %s171
    %p173 = scmp.eq.s32.totalorder %s21, 0
    %p174 = por %p172, %p173
    %s176 = sadd.s32 %s175, 1
    %p179 = scmp.eq.s32.totalorder %s15, 1
    %p180 = scmp.ne.s32.totalorder %s175, %s177
    %p181 = scmp.eq.s32.totalorder %s15, 0
    %p182 = por %p180, %p181
    %p183 = scmp.ne.s32.totalorder %s175, %s177
    %p184 = scmp.eq.s32.totalorder %s20, 1
    %p185 = por %p183, %p184
    %p186 = scmp.ne.s32.totalorder %s177, %s178
    %p187 = scmp.eq.s32.totalorder %s20, 0
    %p188 = por %p186, %p187
    %p189 = scmp.ne.s32.totalorder %s177, %s178
    %p190 = scmp.eq.s32.totalorder %s21, 1
    %p191 = por %p189, %p190
    %p193 = scmp.ne.s32.totalorder %s178, %s192
    %p194 = scmp.eq.s32.totalorder %s21, 0
    %p195 = por %p193, %p194
    %s196 = ssub.s32 %s15, %s22
    %p197 = scmp.eq.s32.totalorder %s196, 0
    %s199 = sadd.s32 %s198, 1
    %s200 = scalar_select %p197, %s198, %s199
    %p203 = pneg %p197
    %p204 = scmp.eq.s32.totalorder %s15, 1
    %p205 = por %p203, %p204
    %p206 = scmp.ne.s32.totalorder %s198, %s201
    %p207 = scmp.eq.s32.totalorder %s15, 0
    %p208 = por %p206, %p207
    %p209 = scmp.ne.s32.totalorder %s198, %s201
    %p210 = scmp.eq.s32.totalorder %s20, 1
    %p211 = por %p209, %p210
    %p212 = scmp.ne.s32.totalorder %s201, %s202
    %p213 = scmp.eq.s32.totalorder %s20, 0
    %p214 = por %p212, %p213
    %p215 = scmp.ne.s32.totalorder %s201, %s202
    %p216 = scmp.eq.s32.totalorder %s21, 1
    %p217 = por %p215, %p216
    %p219 = scmp.ne.s32.totalorder %s202, %s218
    %p220 = scmp.eq.s32.totalorder %s21, 0
    %p221 = por %p219, %p220
    %p222 = scmp.le.s32.totalorder 1, %s15
    %p223 = scmp.lt.s32.totalorder %s15, 3
    %p224 = pnand %p222, %p223
    %p225 = pneg %p224
    // Predicated region
    $region9: #{tpu_custom_call.1} parent=5 // pred_check
      _
    $region10: #{tpu_custom_call.1} parent=5 // pred_check_branch
      %227 = sbr.rel (%p224) target = $region12
    $region11: #{tpu_custom_call.1} parent=5 // pred_region
      %s228 = ssub.s32 %s15, 1
      // Predicated region
      $region13: #{tpu_custom_call.1} parent=11 // pred_check
        %p229 = pneg %p36
      $region14: #{tpu_custom_call.1} parent=11 // pred_check_branch
        %231 = sbr.rel (%p229) target = $region16
      $region15: #{tpu_custom_call.1} parent=11 // pred_region
        _
      $region16: #{tpu_custom_call.1} parent=11 // pred_fallthru
        _
      // Predicated region
      $region17: #{tpu_custom_call.1} parent=11 // pred_check
        %p232 = pneg %p83
      $region18: #{tpu_custom_call.1} parent=11 // pred_check_branch
        %234 = sbr.rel (%p232) target = $region20
      $region19: #{tpu_custom_call.1} parent=11 // pred_region
        _
      $region20: #{tpu_custom_call.1} parent=11 // pred_fallthru
        _
      // Predicated region
      $region21: #{tpu_custom_call.1} parent=11 // pred_check
        %p235 = pneg %p104
      $region22: #{tpu_custom_call.1} parent=11 // pred_check_branch
        %237 = sbr.rel (%p235) target = $region24
      $region23: #{tpu_custom_call.1} parent=11 // pred_region
        _
      $region24: #{tpu_custom_call.1} parent=11 // pred_fallthru
        _
      // Predicated region
      $region25: #{tpu_custom_call.1} parent=11 // pred_check
        %p238 = pneg %p125
      $region26: #{tpu_custom_call.1} parent=11 // pred_check_branch
        %240 = sbr.rel (%p238) target = $region28
      $region27: #{tpu_custom_call.1} parent=11 // pred_region
        _
      $region28: #{tpu_custom_call.1} parent=11 // pred_fallthru
        _
      // Predicated region
      $region29: #{tpu_custom_call.1} parent=11 // pred_check
        %p241 = pneg %p146
      $region30: #{tpu_custom_call.1} parent=11 // pred_check_branch
        %243 = sbr.rel (%p241) target = $region32
      $region31: #{tpu_custom_call.1} parent=11 // pred_region
        _
      $region32: #{tpu_custom_call.1} parent=11 // pred_fallthru
        _
      // Predicated region
      $region33: #{tpu_custom_call.1} parent=11 // pred_check
        %p244 = pneg %p167
      $region34: #{tpu_custom_call.1} parent=11 // pred_check_branch
        %246 = sbr.rel (%p244) target = $region36
      $region35: #{tpu_custom_call.1} parent=11 // pred_region
        _
      $region36: #{tpu_custom_call.1} parent=11 // pred_fallthru
        _
      // Predicated region
      $region37: #{tpu_custom_call.1} parent=11 // pred_check
        %p247 = pneg %p188
      $region38: #{tpu_custom_call.1} parent=11 // pred_check_branch
        %249 = sbr.rel (%p247) target = $region40
      $region39: #{tpu_custom_call.1} parent=11 // pred_region
        _
      $region40: #{tpu_custom_call.1} parent=11 // pred_fallthru
        _
    $region12: #{tpu_custom_call.1} parent=5 // pred_fallthru
      _
    %p250 = scmp.lt.s32.totalorder %s15, 2
    // Predicated region
    $region41: #{tpu_custom_call.1} parent=5 // pred_check
      %p251 = pneg %p250
    $region42: #{tpu_custom_call.1} parent=5 // pred_check_branch
      %253 = sbr.rel (%p251) target = $region44
    $region43: #{tpu_custom_call.1} parent=5 // pred_region
      // Predicated region
      $region45: #{tpu_custom_call.1} parent=43 // pred_check
        %p254 = pneg %p56
      $region46: #{tpu_custom_call.1} parent=43 // pred_check_branch
        %256 = sbr.rel (%p254) target = $region48
      $region47: #{tpu_custom_call.1} parent=43 // pred_region
        %s257 = smul.u32 64, %s15
        %p258 = scmp.lt.s32.totalorder %s257, 127
        %s259 = scalar_select %p258, %s257, 127
        %s260 = smul.addr %s259, 8
        %s261 = scalar_lea.vmem %s1, %s260
        %s262 = smul.u32 64, %s15
      $region48: #{tpu_custom_call.1} parent=43 // pred_fallthru
        _
    $region44: #{tpu_custom_call.1} parent=5 // pred_fallthru
      _
    %p263 = scmp.le.s32.totalorder 1, %s15
    %p264 = scmp.lt.s32.totalorder %s15, 3
    %p265 = pnand %p263, %p264
    %p266 = pneg %p265
    // Predicated region
    $region49: #{tpu_custom_call.1} parent=5 // pred_check
      _
    $region50: #{tpu_custom_call.1} parent=5 // pred_check_branch
      %268 = sbr.rel (%p265) target = $region52
    $region51: #{tpu_custom_call.1} parent=5 // pred_region
      %s269 = ssub.s32 %s15, 1
      %p270 = pneg %p36
      %p271 = pneg %p33
      %s272 = smul.u32 64, %s20
      %p273 = scmp.lt.s32.totalorder %s272, 127
      %s274 = scalar_select %p273, %s272, 127
      %s275 = smul.addr %s274, 8
      %s276 = scalar_lea.vmem %s1, %s275
      %p277 = pneg %p62
      %p278 = pneg %p59
      %p279 = pneg %p83
      %p280 = pneg %p80
      %p281 = pneg %p104
      %p282 = pneg %p101
      %p283 = pneg %p125
      %p284 = pneg %p122
      %p285 = pneg %p146
      %p286 = pneg %p143
      %p287 = pneg %p167
      %p288 = pneg %p164
      %p289 = pneg %p188
      %p290 = pneg %p185
      %p291 = pneg %p214
      %p292 = pneg %p211
      %s293 = smul.u32 64, %s20
      %p294 = scmp.lt.s32.totalorder %s293, 127
      %s295 = scalar_select %p294, %s293, 127
      %s296 = smul.addr %s295, 8
      %s297 = scalar_lea.vmem %s8, %s296
      %s298 = smul.u32 64, %s20
      %p299 = scmp.lt.s32.totalorder %s298, 127
      %s300 = scalar_select %p299, %s298, 127
      %s301 = smul.addr %s300, 8
      %s302 = scalar_lea.vmem %s1, %s301
      %s303 = smul.u32 64, %s20
      %s304 = smul.u32 64, %s20
      %p305 = scmp.lt.s32.totalorder %s304, 127
      %s306 = scalar_select %p305, %s304, 127
      %s307 = smul.addr %s306, 8
      %s308 = scalar_lea.vmem %s8, %s307
      %s309 = smul.u32 64, %s20
      %s310 = sld [smem:[#allocation2]]
      %v311 = vld [vmem:[%s3] sm:$0xff]
      %v312 = vld [vmem:[%s6] sm:$0xff]
      %v313 = vld [vmem:[%s6 + $0x8] sm:$0xff]
      %v314 = vld [vmem:[%s6 + $0x10] sm:$0xff]
      %v315 = vld [vmem:[%s6 + $0x18] sm:$0xff]
      %v316 = vld [vmem:[%s2] sm:$0x1]
      %v317 = vld [vmem:[%s7] sm:$0x1]
      %v318 = vld [vmem:[%s4] sm:$0x1]
      %v319 = vld [vmem:[%s5] sm:$0x1]
      %v320 = vstv %s310
      %v321 = vmul.f32 %v320, %v319
      %v322 = vadd.f32 %v318, %v321
      loop: start=0, step=1, limit=4
      $region53: #{tpu_custom_call.1} parent=51 // loop_pre_header
        _
      $region54: #{tpu_custom_call.1} parent=51 // loop_header
        %s324 = sphi 0, %s328
        %p325 = scmp.ge.s32.totalorder %s324, 4
      $region55: #{tpu_custom_call.1} parent=51 // loop_header_branch
        %327 = sbr.rel (%p325) target = $region59
      $region56: #{tpu_custom_call.1} parent=51 // loop_body
        %s329 = smul.u32 %s324, 128
        %s330 = scalar_lea.vmem %s302, %s329
        %v331 = vld [vmem:[%s330] sm:$0xff]
        %v332 = vld [vmem:[%s330 + $0x8] sm:$0xff]
        %v333 = vld [vmem:[%s330 + $0x10] sm:$0xff]
        %v334 = vld [vmem:[%s330 + $0x18] sm:$0xff]
        %v335 = vld [vmem:[%s330 + $0x20] sm:$0xff]
        %v336 = vld [vmem:[%s330 + $0x28] sm:$0xff]
        %v337 = vld [vmem:[%s330 + $0x30] sm:$0xff]
        %v338 = vld [vmem:[%s330 + $0x38] sm:$0xff]
        %v339 = vld [vmem:[%s330 + $0x40] sm:$0xff]
        %v340 = vld [vmem:[%s330 + $0x48] sm:$0xff]
        %v341 = vld [vmem:[%s330 + $0x50] sm:$0xff]
        %v342 = vld [vmem:[%s330 + $0x58] sm:$0xff]
        %v343 = vld [vmem:[%s330 + $0x60] sm:$0xff]
        %v344 = vld [vmem:[%s330 + $0x68] sm:$0xff]
        %v345 = vld [vmem:[%s330 + $0x70] sm:$0xff]
        %v346 = vld [vmem:[%s330 + $0x78] sm:$0xff]
        %v348 = vlaneseq
        %v349 = vshrl.u32 %v348, 7
        %v350 = vsub.s32 0, %v349
        %v351 = vrot.slane %v322, %v350
        %vm353 = vcmask 64512
        %v355 = vsel %vm353, %v331, 0
        %v358 = vsel %vm353, %v332, 0
        %v361 = vsel %vm353, %v333, 0
        %v364 = vsel %vm353, %v334, 0
        %v367 = vsel %vm353, %v335, 0
        %v370 = vsel %vm353, %v336, 0
        %v373 = vsel %vm353, %v337, 0
        %v376 = vsel %vm353, %v338, 0
        %v379 = vsel %vm353, %v339, 0
        %v382 = vsel %vm353, %v340, 0
        %v385 = vsel %vm353, %v341, 0
        %v388 = vsel %vm353, %v342, 0
        %v391 = vsel %vm353, %v343, 0
        %v394 = vsel %vm353, %v344, 0
        %v397 = vsel %vm353, %v345, 0
        %v400 = vsel %vm353, %v346, 0
        %402 = vmatprep.subr.mxu0 0.0
        %403 = vmatpush1.msra.mxu0 %v311
        %404 = vmatprep.subr.mxu0 0.0
        %405 = vmatpush1.msra.mxu0 0.0
        %406 = vmatprep.subr.mxu0 0.0
        %407 = vmatpush1.msra.mxu0 0.0
        %408 = vmatprep.subr.mxu0 0.0
        %409 = vmatpush1.msra.mxu0 0.0
        %410 = vmatprep.subr.mxu0 0.0
        %411 = vmatpush1.msra.mxu0 0.0
        %412 = vmatprep.subr.mxu0 0.0
        %413 = vmatpush1.msra.mxu0 0.0
        %414 = vmatprep.subr.mxu0 0.0
        %415 = vmatpush1.msra.mxu0 0.0
        %416 = vmatprep.subr.mxu0 0.0
        %417 = vmatpush1.msra.mxu0 0.0
        %418 = vmatprep.subr.mxu0 0.0
        %419 = vmatpush1.msra.mxu0 0.0
        %420 = vmatprep.subr.mxu0 0.0
        %421 = vmatpush1.msra.mxu0 0.0
        %422 = vmatprep.subr.mxu0 0.0
        %423 = vmatpush1.msra.mxu0 0.0
        %424 = vmatprep.subr.mxu0 0.0
        %425 = vmatpush1.msra.mxu0 0.0
        %426 = vmatprep.subr.mxu0 0.0
        %427 = vmatpush1.msra.mxu0 0.0
        %428 = vmatprep.subr.mxu0 0.0
        %429 = vmatpush1.msra.mxu0 0.0
        %430 = vmatprep.subr.mxu0 0.0
        %431 = vmatpush1.msra.mxu0 0.0
        %432 = vmatprep.subr.mxu0 0.0
        %433 = vmatpush1.msra.mxu0 0.0
        %434 = vmatprep.subr.mxu0 0.0
        %435 = vmatpush1.msra.mxu0 0.0
        %436 = vmatprep.subr.mxu0 0.0
        %437 = vmatpush1.msra.mxu0 0.0
        %438 = vmatprep.subr.mxu0 0.0
        %439 = vmatpush1.msra.mxu0 0.0
        %440 = vmatprep.subr.mxu0 0.0
        %441 = vmatpush1.msra.mxu0 0.0
        %442 = vmatprep.subr.mxu0 0.0
        %443 = vmatpush1.msra.mxu0 0.0
        %444 = vmatprep.subr.mxu0 0.0
        %445 = vmatpush1.msra.mxu0 0.0
        %446 = vmatprep.subr.mxu0 0.0
        %447 = vmatpush1.msra.mxu0 0.0
        %448 = vmatprep.subr.mxu0 0.0
        %449 = vmatpush1.msra.mxu0 0.0
        %450 = vmatprep.subr.mxu0 0.0
        %451 = vmatpush1.msra.mxu0 0.0
        %452 = vmatprep.subr.mxu0 0.0
        %453 = vmatpush1.msra.mxu0 0.0
        %454 = vmatprep.subr.mxu0 0.0
        %455 = vmatpush1.msra.mxu0 0.0
        %456 = vmatprep.subr.mxu0 0.0
        %457 = vmatpush1.msra.mxu0 0.0
        %458 = vmatprep.subr.mxu0 0.0
        %459 = vmatpush1.msra.mxu0 0.0
        %460 = vmatprep.subr.mxu0 0.0
        %461 = vmatpush1.msra.mxu0 0.0
        %462 = vmatprep.subr.mxu0 0.0
        %463 = vmatpush1.msra.mxu0 0.0
        %464 = vmatprep.subr.mxu0 0.0
        %465 = vmatpush1.msra.mxu0 0.0
        %466 = vmatprep.mubr.f32.mxu0 0.0
        %467 = vmatmul.mubr.f32.gmra.mrb[0].mxu0 %v355
        %v468 = vpop.f32.mrb[0].mxu0
        %v469 = vadd.f32 %v351, %v468
        %v470 = vpop.f32.mrb[0].mxu0
        %471 = vmatprep.mubr.f32.mxu0 0.0
        %472 = vmatmul.mubr.f32.gmra.mrb[0].mxu0 %v358
        %v473 = vpop.f32.mrb[0].mxu0
        %v474 = vadd.f32 %v351, %v473
        %v475 = vpop.f32.mrb[0].mxu0
        %476 = vmatprep.mubr.f32.mxu0 0.0
        %477 = vmatmul.mubr.f32.gmra.mrb[0].mxu0 %v361
        %v478 = vpop.f32.mrb[0].mxu0
        %v479 = vadd.f32 %v351, %v478
        %v480 = vpop.f32.mrb[0].mxu0
        %481 = vmatprep.mubr.f32.mxu0 0.0
        %482 = vmatmul.mubr.f32.gmra.mrb[0].mxu0 %v364
        %v483 = vpop.f32.mrb[0].mxu0
        %v484 = vadd.f32 %v351, %v483
        %v485 = vpop.f32.mrb[0].mxu0
        %486 = vmatprep.mubr.f32.mxu0 0.0
        %487 = vmatmul.mubr.f32.gmra.mrb[0].mxu0 %v367
        %v488 = vpop.f32.mrb[0].mxu0
        %v489 = vadd.f32 %v351, %v488
        %v490 = vpop.f32.mrb[0].mxu0
        %491 = vmatprep.mubr.f32.mxu0 0.0
        %492 = vmatmul.mubr.f32.gmra.mrb[0].mxu0 %v370
        %v493 = vpop.f32.mrb[0].mxu0
        %v494 = vadd.f32 %v351, %v493
        %v495 = vpop.f32.mrb[0].mxu0
        %496 = vmatprep.mubr.f32.mxu0 0.0
        %497 = vmatmul.mubr.f32.gmra.mrb[0].mxu0 %v373
        %v498 = vpop.f32.mrb[0].mxu0
        %v499 = vadd.f32 %v351, %v498
        %v500 = vpop.f32.mrb[0].mxu0
        %501 = vmatprep.mubr.f32.mxu0 0.0
        %502 = vmatmul.mubr.f32.gmra.mrb[0].mxu0 %v376
        %v503 = vpop.f32.mrb[0].mxu0
        %v504 = vadd.f32 %v351, %v503
        %v505 = vpop.f32.mrb[0].mxu0
        %506 = vmatprep.mubr.f32.mxu0 0.0
        %507 = vmatmul.mubr.f32.gmra.mrb[0].mxu0 %v379
        %v508 = vpop.f32.mrb[0].mxu0
        %v509 = vadd.f32 %v351, %v508
        %v510 = vpop.f32.mrb[0].mxu0
        %511 = vmatprep.mubr.f32.mxu0 0.0
        %512 = vmatmul.mubr.f32.gmra.mrb[0].mxu0 %v382
        %v513 = vpop.f32.mrb[0].mxu0
        %v514 = vadd.f32 %v351, %v513
        %v515 = vpop.f32.mrb[0].mxu0
        %516 = vmatprep.mubr.f32.mxu0 0.0
        %517 = vmatmul.mubr.f32.gmra.mrb[0].mxu0 %v385
        %v518 = vpop.f32.mrb[0].mxu0
        %v519 = vadd.f32 %v351, %v518
        %v520 = vpop.f32.mrb[0].mxu0
        %521 = vmatprep.mubr.f32.mxu0 0.0
        %522 = vmatmul.mubr.f32.gmra.mrb[0].mxu0 %v388
        %v523 = vpop.f32.mrb[0].mxu0
        %v524 = vadd.f32 %v351, %v523
        %v525 = vpop.f32.mrb[0].mxu0
        %526 = vmatprep.mubr.f32.mxu0 0.0
        %527 = vmatmul.mubr.f32.gmra.mrb[0].mxu0 %v391
        %v528 = vpop.f32.mrb[0].mxu0
        %v529 = vadd.f32 %v351, %v528
        %v530 = vpop.f32.mrb[0].mxu0
        %531 = vmatprep.mubr.f32.mxu0 0.0
        %532 = vmatmul.mubr.f32.gmra.mrb[0].mxu0 %v394
        %v533 = vpop.f32.mrb[0].mxu0
        %v534 = vadd.f32 %v351, %v533
        %v535 = vpop.f32.mrb[0].mxu0
        %536 = vmatprep.mubr.f32.mxu0 0.0
        %537 = vmatmul.mubr.f32.gmra.mrb[0].mxu0 %v397
        %v538 = vpop.f32.mrb[0].mxu0
        %v539 = vadd.f32 %v351, %v538
        %v540 = vpop.f32.mrb[0].mxu0
        %541 = vmatprep.mubr.f32.mxu0 0.0
        %542 = vmatmul.mubr.f32.gmra.mrb[0].mxu0 %v400
        %v543 = vpop.f32.mrb[0].mxu0
        %v544 = vadd.f32 %v351, %v543
        %v545 = vpop.f32.mrb[0].mxu0
        %546 = vdwg.mxu0
        %v547 = vtanh.pop %v469
        %v548 = vtanh.pop %v474
        %v549 = vtanh.pop %v479
        %v550 = vtanh.pop %v484
        %v551 = vtanh.pop %v489
        %v552 = vtanh.pop %v494
        %v553 = vtanh.pop %v499
        %v554 = vtanh.pop %v504
        %v555 = vtanh.pop %v509
        %v556 = vtanh.pop %v514
        %v557 = vtanh.pop %v519
        %v558 = vtanh.pop %v524
        %v559 = vtanh.pop %v529
        %v560 = vtanh.pop %v534
        %v561 = vtanh.pop %v539
        %v562 = vtanh.pop %v544
        %v564 = vlaneseq
        %v565 = vshrl.u32 %v564, 7
        %v566 = vsub.s32 0, %v565
        %v567 = vrot.slane %v317, %v566
        %vm569 = vcmask 261120
        %v571 = vsel %vm569, %v547, 0
        %v574 = vsel %vm569, %v548, 0
        %v577 = vsel %vm569, %v549, 0
        %v580 = vsel %vm569, %v550, 0
        %v583 = vsel %vm569, %v551, 0
        %v586 = vsel %vm569, %v552, 0
        %v589 = vsel %vm569, %v553, 0
        %v592 = vsel %vm569, %v554, 0
        %v595 = vsel %vm569, %v555, 0
        %v598 = vsel %vm569, %v556, 0
        %v601 = vsel %vm569, %v557, 0
        %v604 = vsel %vm569, %v558, 0
        %v607 = vsel %vm569, %v559, 0
        %v610 = vsel %vm569, %v560, 0
        %v613 = vsel %vm569, %v561, 0
        %v616 = vsel %vm569, %v562, 0
        %618 = vmatprep.subr.mxu0 0.0
        %619 = vmatpush1.msra.mxu0 %v312
        %620 = vmatprep.subr.mxu0 0.0
        %621 = vmatpush1.msra.mxu0 %v313
        %622 = vmatprep.subr.mxu0 0.0
        %623 = vmatpush1.msra.mxu0 %v314
        %624 = vmatprep.subr.mxu0 0.0
        %625 = vmatpush1.msra.mxu0 %v315
        %626 = vmatprep.subr.mxu0 0.0
        %627 = vmatpush1.msra.mxu0 0.0
        %628 = vmatprep.subr.mxu0 0.0
        %629 = vmatpush1.msra.mxu0 0.0
        %630 = vmatprep.subr.mxu0 0.0
        %631 = vmatpush1.msra.mxu0 0.0
        %632 = vmatprep.subr.mxu0 0.0
        %633 = vmatpush1.msra.mxu0 0.0
        %634 = vmatprep.subr.mxu0 0.0
        %635 = vmatpush1.msra.mxu0 0.0
        %636 = vmatprep.subr.mxu0 0.0
        %637 = vmatpush1.msra.mxu0 0.0
        %638 = vmatprep.subr.mxu0 0.0
        %639 = vmatpush1.msra.mxu0 0.0
        %640 = vmatprep.subr.mxu0 0.0
        %641 = vmatpush1.msra.mxu0 0.0
        %642 = vmatprep.subr.mxu0 0.0
        %643 = vmatpush1.msra.mxu0 0.0
        %644 = vmatprep.subr.mxu0 0.0
        %645 = vmatpush1.msra.mxu0 0.0
        %646 = vmatprep.subr.mxu0 0.0
        %647 = vmatpush1.msra.mxu0 0.0
        %648 = vmatprep.subr.mxu0 0.0
        %649 = vmatpush1.msra.mxu0 0.0
        %650 = vmatprep.subr.mxu0 0.0
        %651 = vmatpush1.msra.mxu0 0.0
        %652 = vmatprep.subr.mxu0 0.0
        %653 = vmatpush1.msra.mxu0 0.0
        %654 = vmatprep.subr.mxu0 0.0
        %655 = vmatpush1.msra.mxu0 0.0
        %656 = vmatprep.subr.mxu0 0.0
        %657 = vmatpush1.msra.mxu0 0.0
        %658 = vmatprep.subr.mxu0 0.0
        %659 = vmatpush1.msra.mxu0 0.0
        %660 = vmatprep.subr.mxu0 0.0
        %661 = vmatpush1.msra.mxu0 0.0
        %662 = vmatprep.subr.mxu0 0.0
        %663 = vmatpush1.msra.mxu0 0.0
        %664 = vmatprep.subr.mxu0 0.0
        %665 = vmatpush1.msra.mxu0 0.0
        %666 = vmatprep.subr.mxu0 0.0
        %667 = vmatpush1.msra.mxu0 0.0
        %668 = vmatprep.subr.mxu0 0.0
        %669 = vmatpush1.msra.mxu0 0.0
        %670 = vmatprep.subr.mxu0 0.0
        %671 = vmatpush1.msra.mxu0 0.0
        %672 = vmatprep.subr.mxu0 0.0
        %673 = vmatpush1.msra.mxu0 0.0
        %674 = vmatprep.subr.mxu0 0.0
        %675 = vmatpush1.msra.mxu0 0.0
        %676 = vmatprep.subr.mxu0 0.0
        %677 = vmatpush1.msra.mxu0 0.0
        %678 = vmatprep.subr.mxu0 0.0
        %679 = vmatpush1.msra.mxu0 0.0
        %680 = vmatprep.subr.mxu0 0.0
        %681 = vmatpush1.msra.mxu0 0.0
        %682 = vmatprep.mubr.f32.mxu0 0.0
        %683 = vmatmul.mubr.f32.gmra.mrb[0].mxu0 %v571
        %v684 = vpop.f32.mrb[0].mxu0
        %v685 = vadd.f32 %v567, %v684
        %v686 = vpop.f32.mrb[0].mxu0
        %687 = vmatprep.mubr.f32.mxu0 0.0
        %688 = vmatmul.mubr.f32.gmra.mrb[0].mxu0 %v574
        %v689 = vpop.f32.mrb[0].mxu0
        %v690 = vadd.f32 %v567, %v689
        %v691 = vpop.f32.mrb[0].mxu0
        %692 = vmatprep.mubr.f32.mxu0 0.0
        %693 = vmatmul.mubr.f32.gmra.mrb[0].mxu0 %v577
        %v694 = vpop.f32.mrb[0].mxu0
        %v695 = vadd.f32 %v567, %v694
        %v696 = vpop.f32.mrb[0].mxu0
        %697 = vmatprep.mubr.f32.mxu0 0.0
        %698 = vmatmul.mubr.f32.gmra.mrb[0].mxu0 %v580
        %v699 = vpop.f32.mrb[0].mxu0
        %v700 = vadd.f32 %v567, %v699
        %v701 = vpop.f32.mrb[0].mxu0
        %702 = vmatprep.mubr.f32.mxu0 0.0
        %703 = vmatmul.mubr.f32.gmra.mrb[0].mxu0 %v583
        %v704 = vpop.f32.mrb[0].mxu0
        %v705 = vadd.f32 %v567, %v704
        %v706 = vpop.f32.mrb[0].mxu0
        %707 = vmatprep.mubr.f32.mxu0 0.0
        %708 = vmatmul.mubr.f32.gmra.mrb[0].mxu0 %v586
        %v709 = vpop.f32.mrb[0].mxu0
        %v710 = vadd.f32 %v567, %v709
        %v711 = vpop.f32.mrb[0].mxu0
        %712 = vmatprep.mubr.f32.mxu0 0.0
        %713 = vmatmul.mubr.f32.gmra.mrb[0].mxu0 %v589
        %v714 = vpop.f32.mrb[0].mxu0
        %v715 = vadd.f32 %v567, %v714
        %v716 = vpop.f32.mrb[0].mxu0
        %717 = vmatprep.mubr.f32.mxu0 0.0
        %718 = vmatmul.mubr.f32.gmra.mrb[0].mxu0 %v592
        %v719 = vpop.f32.mrb[0].mxu0
        %v720 = vadd.f32 %v567, %v719
        %v721 = vpop.f32.mrb[0].mxu0
        %722 = vmatprep.mubr.f32.mxu0 0.0
        %723 = vmatmul.mubr.f32.gmra.mrb[0].mxu0 %v595
        %v724 = vpop.f32.mrb[0].mxu0
        %v725 = vadd.f32 %v567, %v724
        %v726 = vpop.f32.mrb[0].mxu0
        %727 = vmatprep.mubr.f32.mxu0 0.0
        %728 = vmatmul.mubr.f32.gmra.mrb[0].mxu0 %v598
        %v729 = vpop.f32.mrb[0].mxu0
        %v730 = vadd.f32 %v567, %v729
        %v731 = vpop.f32.mrb[0].mxu0
        %732 = vmatprep.mubr.f32.mxu0 0.0
        %733 = vmatmul.mubr.f32.gmra.mrb[0].mxu0 %v601
        %v734 = vpop.f32.mrb[0].mxu0
        %v735 = vadd.f32 %v567, %v734
        %v736 = vpop.f32.mrb[0].mxu0
        %737 = vmatprep.mubr.f32.mxu0 0.0
        %738 = vmatmul.mubr.f32.gmra.mrb[0].mxu0 %v604
        %v739 = vpop.f32.mrb[0].mxu0
        %v740 = vadd.f32 %v567, %v739
        %v741 = vpop.f32.mrb[0].mxu0
        %742 = vmatprep.mubr.f32.mxu0 0.0
        %743 = vmatmul.mubr.f32.gmra.mrb[0].mxu0 %v607
        %v744 = vpop.f32.mrb[0].mxu0
        %v745 = vadd.f32 %v567, %v744
        %v746 = vpop.f32.mrb[0].mxu0
        %747 = vmatprep.mubr.f32.mxu0 0.0
        %748 = vmatmul.mubr.f32.gmra.mrb[0].mxu0 %v610
        %v749 = vpop.f32.mrb[0].mxu0
        %v750 = vadd.f32 %v567, %v749
        %v751 = vpop.f32.mrb[0].mxu0
        %752 = vmatprep.mubr.f32.mxu0 0.0
        %753 = vmatmul.mubr.f32.gmra.mrb[0].mxu0 %v613
        %v754 = vpop.f32.mrb[0].mxu0
        %v755 = vadd.f32 %v567, %v754
        %v756 = vpop.f32.mrb[0].mxu0
        %757 = vmatprep.mubr.f32.mxu0 0.0
        %758 = vmatmul.mubr.f32.gmra.mrb[0].mxu0 %v616
        %v759 = vpop.f32.mrb[0].mxu0
        %v760 = vadd.f32 %v567, %v759
        %v761 = vpop.f32.mrb[0].mxu0
        %762 = vdwg.mxu0
        %v764 = vlaneseq
        %v765 = vshrl.u32 %v764, 7
        %v766 = vsub.s32 0, %v765
        %v767 = vrot.slane %v316, %v766
        %v769 = vmul.f32 %v767, %v331
        %v770 = vmul.f32 %v767, %v332
        %v771 = vmul.f32 %v767, %v333
        %v772 = vmul.f32 %v767, %v334
        %v773 = vmul.f32 %v767, %v335
        %v774 = vmul.f32 %v767, %v336
        %v775 = vmul.f32 %v767, %v337
        %v776 = vmul.f32 %v767, %v338
        %v777 = vmul.f32 %v767, %v339
        %v778 = vmul.f32 %v767, %v340
        %v779 = vmul.f32 %v767, %v341
        %v780 = vmul.f32 %v767, %v342
        %v781 = vmul.f32 %v767, %v343
        %v782 = vmul.f32 %v767, %v344
        %v783 = vmul.f32 %v767, %v345
        %v784 = vmul.f32 %v767, %v346
        %v785 = vadd.f32 %v769, %v685
        %v786 = vadd.f32 %v770, %v690
        %v787 = vadd.f32 %v771, %v695
        %v788 = vadd.f32 %v772, %v700
        %v789 = vadd.f32 %v773, %v705
        %v790 = vadd.f32 %v774, %v710
        %v791 = vadd.f32 %v775, %v715
        %v792 = vadd.f32 %v776, %v720
        %v793 = vadd.f32 %v777, %v725
        %v794 = vadd.f32 %v778, %v730
        %v795 = vadd.f32 %v779, %v735
        %v796 = vadd.f32 %v780, %v740
        %v797 = vadd.f32 %v781, %v745
        %v798 = vadd.f32 %v782, %v750
        %v799 = vadd.f32 %v783, %v755
        %v800 = vadd.f32 %v784, %v760
        %s801 = scalar_lea.vmem %s308, %s329
        %802 = vst.msk [vmem:[%s801] sm:$0xff] %vm353, %v785
        %803 = vst.msk [vmem:[%s801 + $0x8] sm:$0xff] %vm353, %v786
        %804 = vst.msk [vmem:[%s801 + $0x10] sm:$0xff] %vm353, %v787
        %805 = vst.msk [vmem:[%s801 + $0x18] sm:$0xff] %vm353, %v788
        %806 = vst.msk [vmem:[%s801 + $0x20] sm:$0xff] %vm353, %v789
        %807 = vst.msk [vmem:[%s801 + $0x28] sm:$0xff] %vm353, %v790
        %808 = vst.msk [vmem:[%s801 + $0x30] sm:$0xff] %vm353, %v791
        %809 = vst.msk [vmem:[%s801 + $0x38] sm:$0xff] %vm353, %v792
        %810 = vst.msk [vmem:[%s801 + $0x40] sm:$0xff] %vm353, %v793
        %811 = vst.msk [vmem:[%s801 + $0x48] sm:$0xff] %vm353, %v794
        %812 = vst.msk [vmem:[%s801 + $0x50] sm:$0xff] %vm353, %v795
        %813 = vst.msk [vmem:[%s801 + $0x58] sm:$0xff] %vm353, %v796
        %814 = vst.msk [vmem:[%s801 + $0x60] sm:$0xff] %vm353, %v797
        %815 = vst.msk [vmem:[%s801 + $0x68] sm:$0xff] %vm353, %v798
        %816 = vst.msk [vmem:[%s801 + $0x70] sm:$0xff] %vm353, %v799
        %817 = vst.msk [vmem:[%s801 + $0x78] sm:$0xff] %vm353, %v800
      $region57: #{tpu_custom_call.1} parent=51 // loop_footer
        %s328 = sadd.s32 1, %s324
      $region58: #{tpu_custom_call.1} parent=51 // loop_footer_branch
        %323 = sbr.rel target = $region54
      $region59: #{tpu_custom_call.1} parent=51 // loop_exit
        _
      %s818 = smul.u32 64, %s20
      %p819 = scmp.lt.s32.totalorder %s818, 127
      %s820 = scalar_select %p819, %s818, 127
      %s821 = smul.addr %s820, 8
      %s822 = scalar_lea.vmem %s8, %s821
      // Predicated region
      $region60: #{tpu_custom_call.1} parent=51 // pred_check
        %p823 = pneg %p211
      $region61: #{tpu_custom_call.1} parent=51 // pred_check_branch
        %825 = sbr.rel (%p823) target = $region63
      $region62: #{tpu_custom_call.1} parent=51 // pred_region
        %s826 = smul.u32 64, %s20
      $region63: #{tpu_custom_call.1} parent=51 // pred_fallthru
        _
    $region52: #{tpu_custom_call.1} parent=5 // pred_fallthru
      _
    %p827 = scmp.le.s32.totalorder 2, %s15
    // Predicated region
    $region64: #{tpu_custom_call.1} parent=5 // pred_check
      %p828 = pneg %p827
    $region65: #{tpu_custom_call.1} parent=5 // pred_check_branch
      %830 = sbr.rel (%p828) target = $region67
    $region66: #{tpu_custom_call.1} parent=5 // pred_region
      %s831 = ssub.s32 %s15, 2
      // Predicated region
      $region68: #{tpu_custom_call.1} parent=66 // pred_check
        %p832 = pneg %p217
      $region69: #{tpu_custom_call.1} parent=66 // pred_check_branch
        %834 = sbr.rel (%p832) target = $region71
      $region70: #{tpu_custom_call.1} parent=66 // pred_region
        %s835 = smul.u32 64, %s21
        %p836 = scmp.lt.s32.totalorder %s835, 127
        %s837 = scalar_select %p836, %s835, 127
        %s838 = smul.addr %s837, 8
        %s839 = scalar_lea.vmem %s8, %s838
      $region71: #{tpu_custom_call.1} parent=66 // pred_fallthru
        _
    $region67: #{tpu_custom_call.1} parent=5 // pred_fallthru
      _
  $region6: #{tpu_custom_call.1} parent=0 // loop_footer
    %s19 = sadd.s32 1, %s15
  $region7: #{tpu_custom_call.1} parent=0 // loop_footer_branch
    %14 = sbr.rel target = $region3
  $region8: #{tpu_custom_call.1} parent=0 // loop_exit
    _

</llo_original>
